<compile_context>
chip_gen: v6e
topology: v6e:2x2x1
jax: 0.10.0
libtpu: 0.0.40
codegen_flags: <defaults>
</compile_context>

<pallas_src>
import math
from functools import partial

import jax
import jax.numpy as jnp
from jax.experimental import pallas as pl
from jax.experimental.pallas import tpu as pltpu


# ---------------------------------------------------------------------------
# Kernel
# ---------------------------------------------------------------------------

def _pool_conv_kernel(x_ref, w_ref, b_ref, o_ref, *, wo, ho, odd_h, odd_w, groups):
    """2x2 avg-pool (divisor folded into w) + 1x1 conv on an NHWC row-pair tile.

    x_ref: (bm, 2, Wo, 2*Cin)   w_ref: (Cin, Cout)   b_ref: (1, Cout) f32
    o_ref: (bm*Wo, Cout)
    `groups` = bm // Ho when the ceil_mode / count_include_pad=False edge correction is
    needed (odd H and/or W), else 0.  Blocks are then aligned to whole Ho groups so the
    correction comes from iotas only (no HBM side input, no vector int div/mod).
    """
    bm = x_ref.shape[0]
    cin = x_ref.shape[3] // 2

    x = x_ref[...]
    xr = x[:, 0] + x[:, 1]                           # sum the two H rows   (full-vreg VPU add)
    pooled = xr[:, :, :cin] + xr[:, :, cin:]         # sum even/odd W cols  (contiguous lane slices)

    if groups:                                       # edge windows divide by their valid count
        p4 = pooled.reshape(groups, ho, wo, cin)     # free leading-dim split (bm == groups*Ho)
        if odd_h:
            hh = jax.lax.broadcasted_iota(jnp.int32, (groups, ho, 1, 1), 1)
            p4 = p4 * jnp.where(hh == ho - 1, 2.0, 1.0).astype(p4.dtype)   # exact x2
        if odd_w:
            ww = jax.lax.broadcasted_iota(jnp.int32, (groups, ho, wo, 1), 2)
            p4 = p4 * jnp.where(ww == wo - 1, 2.0, 1.0).astype(p4.dtype)   # exact x2
        pooled = p4.reshape(bm, wo, cin)             # free leading-dim merge

    pooled = pooled.reshape(bm * wo, cin)            # flatten M for the MXU
    y = jnp.dot(pooled, w_ref[...], preferred_element_type=jnp.float32)
    o_ref[...] = (y + b_ref[...]).astype(o_ref.dtype)


# ---------------------------------------------------------------------------
# Tiling / VMEM helpers
# ---------------------------------------------------------------------------

def _cdiv(a, b):
    return -(-a // b)


def _round_up(a, b):
    return _cdiv(a, b) * b


def _lcm(a, b):
    return a * b // math.gcd(a, b)


def _vmem_limit_bytes():
    """Generation-aware VMEM budget: ~96 MiB on 128 MiB parts (v5e/v6e), ~48 MiB on v7x."""
    cap = 64 * 2**20                       # conservative (v7x-sized) fallback
    try:
        c = int(pltpu.get_tpu_info().vmem_capacity_bytes)
        if 16 * 2**20 <= c <= 1024 * 2**20:
            cap = c
    except Exception:
        pass
    return min(cap * 3 // 4, 100 * 2**20)


def _choose_bm(num_rows, wo, ho, cin, cout, isz, vmem_limit, needs_edge):
    """Rows-per-step `bm` (bm*Wo is the matmul M per step) and `groups` for the edge path."""
    # sublane alignment for the (bm*Wo, Cout) output block
    sub = 16 if isz < 4 else 8
    q = sub // math.gcd(wo, sub)
    if needs_edge:
        q = _lcm(q, ho)                    # edge kernel views the block as (groups, Ho, Wo, Cin)

    # --- VMEM-driven upper bound (x2 double-buffered in/out, weights, f32 intermediate) ---
    x_row = 2 * wo * 2 * cin * isz                       # x-tile bytes per row-pair
    out_row = wo * cout * isz
    inter_row = wo * (cin * isz + cout * 4) + x_row // 2  # pooled copy + f32 matmul result + H-sum
    per_bm = 2 * x_row + 2 * out_row + inter_row
    fixed = 2 * cin * cout * isz + cout * 4 + (2 << 20)   # weights (x2 buffered), bias, slack
    budget = int(vmem_limit * 0.9)
    if budget > fixed + q * per_bm:
        bm_vmem = max(q, (budget - fixed) // per_bm // q * q)
    else:
        bm_vmem = q

    # --- target ~8 MiB of input per grid step (amortise the ~0.35us/step overhead) ---
    bm_tgt = max(q, _round_up(_cdiv(8 << 20, x_row), q))

    bm = min(bm_vmem, bm_tgt)

    # --- keep the pipeline busy: prefer >=4 (>=2) grid steps whenever the problem allows ---
    if num_rows >= 4 * q:
        bm = min(bm, _round_up(_cdiv(num_rows, 4), q))
    elif num_rows >= 2 * q:
        bm = min(bm, _round_up(_cdiv(num_rows, 2), q))
    bm = max(q, min(bm, _round_up(num_rows, q)))

    groups = (bm // ho) if needs_edge else 0
    return bm, groups


# ---------------------------------------------------------------------------
# Pallas wrapper (NHWC core)
# ---------------------------------------------------------------------------

def _pool_conv_nhwc(x, w2, b32, *, n, h, w, cin, cout):
    """AvgPool2d(2, 2, ceil_mode=True, count_include_pad=False) + 1x1 conv, NHWC."""
    cdt = x.dtype
    isz = jnp.dtype(cdt).itemsize
    ho, wo = _cdiv(h, 2), _cdiv(w, 2)                    # ceil_mode=True
    he, we = 2 * ho, 2 * wo
    needs_edge = (he != h) or (we != w)
    if needs_edge:
        # zero pad so the row-pair view below is a free reshape (only odd H/W; ImageNet
        # ResNet downsample shapes are even so this copy does not occur in practice).
        x = jnp.pad(x, ((0, 0), (0, he - h), (0, we - w), (0, 0)))

    num_rows = n * ho                                    # output rows across batch
    m_total = num_rows * wo
    xv = x.reshape(num_rows, 2, wo, 2 * cin)             # FREE view of NHWC
    wq = (w2.astype(jnp.float32) * 0.25).T.astype(cdt)   # (Cin, Cout), pool divisor folded (exact)
    bq = b32.reshape(1, cout)

    limit = _vmem_limit_bytes()
    bm, groups = _choose_bm(num_rows, wo, ho, cin, cout, isz, limit, needs_edge)

    kernel = partial(_pool_conv_kernel, wo=wo, ho=ho,
                     odd_h=(he != h), odd_w=(we != w), groups=groups)

    out = pl.pallas_call(
        kernel,
        out_shape=jax.ShapeDtypeStruct((m_total, cout), cdt),
        grid_spec=pltpu.PrefetchScalarGridSpec(
            num_scalar_prefetch=0,
            grid=(pl.cdiv(num_rows, bm),),
            in_specs=[
                pl.BlockSpec((bm, 2, wo, 2 * cin), lambda i: (i, 0, 0, 0)),
                pl.BlockSpec((cin, cout), lambda i: (0, 0)),
                pl.BlockSpec((1, cout), lambda i: (0, 0)),
            ],
            out_specs=pl.BlockSpec((bm * wo, cout), lambda i: (i, 0)),
        ),
        compiler_params=pltpu.CompilerParams(
            dimension_semantics=("parallel",),
            vmem_limit_bytes=limit),
    )(xv, wq, bq)
    return out.reshape(n, ho, wo, cout)                  # free view


# ---------------------------------------------------------------------------
# Public entry point (matches the PyTorch module: NCHW in / NCHW out by default)
# ---------------------------------------------------------------------------

def downsample_avg(x, w_oihw, b_o, *, stride=2, dilation=1, data_format="NCHW"):
    """DownsampleAvg forward.

    x: (N,Cin,H,W) if data_format=="NCHW" (PyTorch layout) else (N,H,W,Cin).
    w_oihw: (Cout,Cin,1,1), b_o: (Cout,).
    """
    assert dilation == 1, "TODO(synk): AvgPool2dSame (dilation>1) path not implemented"
    assert stride in (1, 2), "AvgPool2d(2, stride): only stride 1 or 2 supported"
    assert data_format in ("NCHW", "NHWC")

    cout, cin = w_oihw.shape[0], w_oihw.shape[1]
    w2 = w_oihw.reshape(cout, cin)
    cdt = x.dtype
    b32 = b_o.astype(jnp.float32)

    if stride == 1:
        # Pool is Identity -> plain 1x1 conv.  Native XLA matmul in the incoming layout:
        # no Pallas, no wrapper transposes, no extra HBM round trips.  (perf-review item)
        if data_format == "NCHW":
            y = jnp.einsum("oc,nchw->nohw", w2.astype(cdt), x,
                           preferred_element_type=jnp.float32)
            return (y + b32[None, :, None, None]).astype(cdt)
        y = jnp.einsum("nhwc,oc->nhwo", x, w2.astype(cdt),
                       preferred_element_type=jnp.float32)
        return (y + b32[None, None, None, :]).astype(cdt)

    # stride == 2
    if data_format == "NCHW":
        n, _, h, w = x.shape
        # TODO(synk): these two copies (NCHW->NHWC, NHWC->NCHW) are the remaining HBM
        # overhead; keep activations NHWC end-to-end (data_format="NHWC") to skip them.
        x = jnp.transpose(x, (0, 2, 3, 1))
        out_nhwc = _pool_conv_nhwc(x, w2, b32, n=n, h=h, w=w, cin=cin, cout=cout)
        return jnp.transpose(out_nhwc, (0, 3, 1, 2))

    n, h, w, _ = x.shape
    return _pool_conv_nhwc(x, w2, b32, n=n, h=h, w=w, cin=cin, cout=cout)


# ---------------------------------------------------------------------------
# Pure-JAX reference + self-test
# ---------------------------------------------------------------------------

def _ref_downsample_avg(x, w, b, *, stride):
    """AvgPool2d(2, 2, ceil_mode=True, count_include_pad=False) + 1x1 conv, NCHW, f32."""
    N, C, H, W = x.shape
    Cout = w.shape[0]
    if stride == 2:
        Ho, Wo = -(-H // 2), -(-W // 2)
        xp = jnp.pad(x, ((0, 0), (0, 0), (0, 2 * Ho - H), (0, 2 * Wo - W)))
        s = xp.reshape(N, C, Ho, 2, Wo, 2).sum(axis=(3, 5))
        rows = jnp.minimum(2, H - 2 * jnp.arange(Ho)).astype(x.dtype)
        cols = jnp.minimum(2, W - 2 * jnp.arange(Wo)).astype(x.dtype)
        x = s / (rows[:, None] * cols[None, :])
    y = jnp.einsum("nchw,oc->nohw", x, w.reshape(Cout, -1),
                   precision=jax.lax.Precision.HIGHEST)
    return y + b[None, :, None, None]


if __name__ == "__main__":
    key = jax.random.PRNGKey(0)
    k1, k2, k3 = jax.random.split(key, 3)

    # DownsampleAvg(in_chs=4, out_chs=8, stride=2, dilation=1, preact=True)
    N, Cin, H, W, Cout = 2, 4, 16, 16, 8
    x = jax.random.normal(k1, (N, Cin, H, W), jnp.float32)
    w = jax.random.normal(k2, (Cout, Cin, 1, 1), jnp.float32) * 0.1   # conv weight
    b = jax.random.normal(k3, (Cout,), jnp.float32) * 0.01            # conv bias

    # stride=2, even H/W (multi-step grid, divisor folded into the weight)
    out = jax.block_until_ready(downsample_avg(x, w, b, stride=2))
    ref = _ref_downsample_avg(x, w, b, stride=2)
    assert out.shape == (N, Cout, H // 2, W // 2)
    assert jnp.allclose(out, ref, atol=1e-5, rtol=1e-5), float(jnp.abs(out - ref).max())

    # NHWC fast path (no wrapper transposes) matches the NCHW result
    out_nhwc = jax.block_until_ready(
        downsample_avg(jnp.transpose(x, (0, 2, 3, 1)), w, b, stride=2, data_format="NHWC"))
    assert jnp.allclose(out_nhwc, jnp.transpose(ref, (0, 2, 3, 1)), atol=1e-5, rtol=1e-5)

    # stride=2, odd H/W (ceil_mode + count_include_pad=False, in-kernel edge correction)
    xo = x[:, :, :15, :15]
    out_o = jax.block_until_ready(downsample_avg(xo, w, b, stride=2))
    ref_o = _ref_downsample_avg(xo, w, b, stride=2)
    assert out_o.shape == (N, Cout, 8, 8)
    assert jnp.allclose(out_o, ref_o, atol=1e-5, rtol=1e-5), float(jnp.abs(out_o - ref_o).max())

    # stride=2, partial final grid block (rows % bm != 0)
    xp = jax.random.normal(k1, (N, Cin, 18, 18), jnp.float32)
    out_p = jax.block_until_ready(downsample_avg(xp, w, b, stride=2))
    ref_p = _ref_downsample_avg(xp, w, b, stride=2)
    assert out_p.shape == (N, Cout, 9, 9)
    assert jnp.allclose(out_p, ref_p, atol=1e-5, rtol=1e-5), float(jnp.abs(out_p - ref_p).max())

    # stride=2, bf16 activations/weights (bf16 MXU feed, f32 accumulation)
    kb1, kb2, kb3 = jax.random.split(jax.random.PRNGKey(0), 3)
    xb = jax.random.normal(kb1, (2, 8, 14, 14), jnp.float32)
    wb = jax.random.normal(kb2, (16, 8, 1, 1), jnp.float32) * 0.1
    bb = jax.random.normal(kb3, (16,), jnp.float32) * 0.01
    out_b = jax.block_until_ready(
        downsample_avg(xb.astype(jnp.bfloat16), wb.astype(jnp.bfloat16),
                       bb.astype(jnp.bfloat16), stride=2))
    ref_b = _ref_downsample_avg(xb.astype(jnp.bfloat16).astype(jnp.float32),
                                wb.astype(jnp.bfloat16).astype(jnp.float32),
                                bb.astype(jnp.bfloat16).astype(jnp.float32), stride=2)
    assert out_b.shape == (2, 16, 7, 7)
    assert jnp.allclose(out_b.astype(jnp.float32), ref_b, atol=2e-2, rtol=5e-2), \
        float(jnp.abs(out_b.astype(jnp.float32) - ref_b).max())

    # stride=1 (pool == Identity; native XLA 1x1 conv, no transposes, no Pallas)
    out_1 = jax.block_until_ready(downsample_avg(x, w, b, stride=1))
    ref_1 = _ref_downsample_avg(x, w, b, stride=1)
    assert out_1.shape == (N, Cout, H, W)
    assert jnp.allclose(out_1, ref_1, atol=1e-5, rtol=1e-5), float(jnp.abs(out_1 - ref_1).max())

    print("KERNEL_OK")
</pallas_src>

<mosaic_0001>
module attributes {stable_mosaic.version = 11 : i64} {
  func.func @_pool_conv_kernel(%arg0: i32, %arg1: memref<4x2x8x8xf32, #tpu.memory_space<vmem>>, %arg2: memref<4x8xf32, #tpu.memory_space<vmem>>, %arg3: memref<1x8xf32, #tpu.memory_space<vmem>>, %arg4: memref<32x8xf32, #tpu.memory_space<vmem>>) attributes {dimension_semantics = [#tpu.dimension_semantics<parallel>], iteration_bounds = array<i64: 4>, scalar_prefetch = 0 : i64, scratch_operands = 0 : i64, tpu.core_type = #tpu.core_type<tc>, window_params = [{transform_indices = @transform_0, window_bounds = array<i64: 4, 2, 8, 8>}, {pipeline_mode = #tpu.pipeline_mode<synchronous>, transform_indices = @transform_1, window_bounds = array<i64: 4, 8>}, {pipeline_mode = #tpu.pipeline_mode<synchronous>, transform_indices = @transform_2, window_bounds = array<i64: 1, 8>}, {transform_indices = @transform_3, window_bounds = array<i64: 32, 8>}]} {
    %c0 = arith.constant 0 : index
    %c0_0 = arith.constant 0 : index
    %c0_1 = arith.constant 0 : index
    %c0_2 = arith.constant 0 : index
    %0 = vector.load %arg1[%c0, %c0_0, %c0_1, %c0_2] : memref<4x2x8x8xf32, #tpu.memory_space<vmem>>, vector<4x2x8x8xf32>
    %1 = vector.extract_strided_slice %0 {offsets = [0, 0, 0, 0], sizes = [4, 1, 8, 8], strides = [1, 1, 1, 1]} : vector<4x2x8x8xf32> to vector<4x1x8x8xf32>
    %2 = vector.shape_cast %1 : vector<4x1x8x8xf32> to vector<4x8x8xf32>
    %3 = vector.extract_strided_slice %0 {offsets = [0, 1, 0, 0], sizes = [4, 1, 8, 8], strides = [1, 1, 1, 1]} : vector<4x2x8x8xf32> to vector<4x1x8x8xf32>
    %4 = vector.shape_cast %3 : vector<4x1x8x8xf32> to vector<4x8x8xf32>
    %5 = arith.addf %2, %4 : vector<4x8x8xf32>
    %6 = vector.extract_strided_slice %5 {offsets = [0, 0, 0], sizes = [4, 8, 4], strides = [1, 1, 1]} : vector<4x8x8xf32> to vector<4x8x4xf32>
    %7 = vector.extract_strided_slice %5 {offsets = [0, 0, 4], sizes = [4, 8, 4], strides = [1, 1, 1]} : vector<4x8x8xf32> to vector<4x8x4xf32>
    %8 = arith.addf %6, %7 : vector<4x8x4xf32>
    %9 = vector.shape_cast %8 : vector<4x8x4xf32> to vector<32x4xf32>
    %c0_3 = arith.constant 0 : index
    %c0_4 = arith.constant 0 : index
    %10 = vector.load %arg2[%c0_3, %c0_4] : memref<4x8xf32, #tpu.memory_space<vmem>>, vector<4x8xf32>
    %cst = arith.constant dense<0.000000e+00> : vector<32x8xf32>
    %11 = tpu.matmul %9, %10, %cst {dimension_numbers = #tpu.dot_dimension_numbers<[1], [0], [0], [1], [0, 0, 1, 1], [], []>} : vector<32x4xf32>, vector<4x8xf32>, vector<32x8xf32> -> vector<32x8xf32>
    %c0_5 = arith.constant 0 : index
    %c0_6 = arith.constant 0 : index
    %12 = vector.load %arg3[%c0_5, %c0_6] : memref<1x8xf32, #tpu.memory_space<vmem>>, vector<1x8xf32>
    %13 = vector.broadcast %12 : vector<1x8xf32> to vector<32x8xf32>
    %14 = arith.addf %11, %13 : vector<32x8xf32>
    %c0_7 = arith.constant 0 : index
    %c0_8 = arith.constant 0 : index
    %15 = vector.load %arg4[%c0_7, %c0_8] : memref<32x8xf32, #tpu.memory_space<vmem>>, vector<32x8xf32>
    tpu.vector_store %arg4[%c0_7, %c0_8], %14 {strides = array<i32>} : memref<32x8xf32, #tpu.memory_space<vmem>>, vector<32x8xf32>,
    return
  }
  func.func @transform_0(%arg0: i32) -> (i32, i32, i32, i32) {
    %c0_i32 = arith.constant 0 : i32
    %c0_i32_0 = arith.constant 0 : i32
    %c0_i32_1 = arith.constant 0 : i32
    %c0_i32_2 = arith.constant 0 : i32
    return %arg0, %c0_i32, %c0_i32_0, %c0_i32_1 : i32, i32, i32, i32
  }
  func.func @transform_1(%arg0: i32) -> (i32, i32) {
    %c0_i32 = arith.constant 0 : i32
    %c0_i32_0 = arith.constant 0 : i32
    %c0_i32_1 = arith.constant 0 : i32
    return %c0_i32, %c0_i32_0 : i32, i32
  }
  func.func @transform_2(%arg0: i32) -> (i32, i32) {
    %c0_i32 = arith.constant 0 : i32
    %c0_i32_0 = arith.constant 0 : i32
    %c0_i32_1 = arith.constant 0 : i32
    return %c0_i32, %c0_i32_0 : i32, i32
  }
  func.func @transform_3(%arg0: i32) -> (i32, i32) {
    %c0_i32 = arith.constant 0 : i32
    %c0_i32_0 = arith.constant 0 : i32
    return %arg0, %c0_i32 : i32, i32
  }
}

</mosaic_0001>

<llo_original>
// kernel: tpu_custom_call.1
$region0: #{tpu_custom_call.1}
  #allocation0 [shape = 'u32[]', space=smem, size = 0x4, offset = 0x4, fixed_abs, tag = 'smem constant byte address 0x4 - core index']
  #allocation1 [shape = 'u32[144,128]{1,0:T(1,128)}', space=vmem, size = 0x12000, scoped, tag = 'internal scratch']
  %s0 = inlined_call_operand.vmem [shape: f32[16,2,8,8], index: 0, kind: input, shape index: {}]
  %s1 = inlined_call_operand.vmem [shape: f32[4,8], index: 1, kind: input, shape index: {}]
  %s2 = inlined_call_operand.vmem [shape: f32[1,8], index: 2, kind: input, shape index: {}]
  %s3 = inlined_call_operand.vmem [shape: f32[128,8], index: 3, kind: output, shape index: {}]
  %s4 = sld [smem:[#allocation0]]
  $region45: #{tpu_custom_call.1} parent=0
    _
  %s6 = ssub.s32 1, %s4
  %s7 = scalar_select 0, %s6, %s4
  loop: start=0, step=1, limit=6
  $region2: #{tpu_custom_call.1} parent=0 // loop_pre_header
    _
  $region3: #{tpu_custom_call.1} parent=0 // loop_header
    %s9 = sphi 0, %s13
    %p10 = scmp.ge.s32.totalorder %s9, 6
    %s19 = sphi 0, %s21
    %s22 = sphi 0, %s19
    %s23 = sphi 0, %s22
    %s39 = sphi 0, %s23
    %s43 = sphi 0, %s43
    %s45 = sphi 0, %s43
    %s46 = sphi 0, %s45
    %s60 = sphi 0, %s46
    %s64 = sphi 0, %s64
    %s66 = sphi 0, %s64
    %s67 = sphi 0, %s66
    %s81 = sphi 0, %s67
    %s87 = sphi 0, %s89
    %s90 = sphi 0, %s87
    %s91 = sphi 0, %s90
    %s107 = sphi 0, %s91
  $region4: #{tpu_custom_call.1} parent=0 // loop_header_branch
    %12 = sbr.rel (%p10) target = $region8
  $region5: #{tpu_custom_call.1} parent=0 // loop_body
    %s14 = ssub.s32 %s9, 1
    %s15 = ssub.s32 %s9, 2
    %s16 = sadd.s32 %s9, 1
    %s17 = ssub.s32 %s9, %s16
    %p18 = scmp.eq.s32.totalorder %s17, 0
    %s20 = sadd.s32 %s19, 1
    %s21 = scalar_select %p18, %s19, %s20
    %p24 = pneg %p18
    %p25 = scmp.eq.s32.totalorder %s9, 3
    %p26 = por %p24, %p25
    %p27 = scmp.ne.s32.totalorder %s19, %s22
    %p28 = scmp.eq.s32.totalorder %s9, 0
    %p29 = por %p27, %p28
    %p30 = scmp.ne.s32.totalorder %s19, %s22
    %p31 = scmp.eq.s32.totalorder %s14, 3
    %p32 = por %p30, %p31
    %p33 = scmp.ne.s32.totalorder %s22, %s23
    %p34 = scmp.eq.s32.totalorder %s14, 0
    %p35 = por %p33, %p34
    %p36 = scmp.ne.s32.totalorder %s22, %s23
    %p37 = scmp.eq.s32.totalorder %s15, 3
    %p38 = por %p36, %p37
    %p40 = scmp.ne.s32.totalorder %s23, %s39
    %p41 = scmp.eq.s32.totalorder %s15, 0
    %p42 = por %p40, %p41
    %s44 = sadd.s32 %s43, 1
    %p47 = scmp.eq.s32.totalorder %s9, 3
    %p48 = scmp.ne.s32.totalorder %s43, %s45
    %p49 = scmp.eq.s32.totalorder %s9, 0
    %p50 = por %p48, %p49
    %p51 = scmp.ne.s32.totalorder %s43, %s45
    %p52 = scmp.eq.s32.totalorder %s14, 3
    %p53 = por %p51, %p52
    %p54 = scmp.ne.s32.totalorder %s45, %s46
    %p55 = scmp.eq.s32.totalorder %s14, 0
    %p56 = por %p54, %p55
    %p57 = scmp.ne.s32.totalorder %s45, %s46
    %p58 = scmp.eq.s32.totalorder %s15, 3
    %p59 = por %p57, %p58
    %p61 = scmp.ne.s32.totalorder %s46, %s60
    %p62 = scmp.eq.s32.totalorder %s15, 0
    %p63 = por %p61, %p62
    %s65 = sadd.s32 %s64, 1
    %p68 = scmp.eq.s32.totalorder %s9, 3
    %p69 = scmp.ne.s32.totalorder %s64, %s66
    %p70 = scmp.eq.s32.totalorder %s9, 0
    %p71 = por %p69, %p70
    %p72 = scmp.ne.s32.totalorder %s64, %s66
    %p73 = scmp.eq.s32.totalorder %s14, 3
    %p74 = por %p72, %p73
    %p75 = scmp.ne.s32.totalorder %s66, %s67
    %p76 = scmp.eq.s32.totalorder %s14, 0
    %p77 = por %p75, %p76
    %p78 = scmp.ne.s32.totalorder %s66, %s67
    %p79 = scmp.eq.s32.totalorder %s15, 3
    %p80 = por %p78, %p79
    %p82 = scmp.ne.s32.totalorder %s67, %s81
    %p83 = scmp.eq.s32.totalorder %s15, 0
    %p84 = por %p82, %p83
    %s85 = ssub.s32 %s9, %s16
    %p86 = scmp.eq.s32.totalorder %s85, 0
    %s88 = sadd.s32 %s87, 1
    %s89 = scalar_select %p86, %s87, %s88
    %p92 = pneg %p86
    %p93 = scmp.eq.s32.totalorder %s9, 3
    %p94 = por %p92, %p93
    %p95 = scmp.ne.s32.totalorder %s87, %s90
    %p96 = scmp.eq.s32.totalorder %s9, 0
    %p97 = por %p95, %p96
    %p98 = scmp.ne.s32.totalorder %s87, %s90
    %p99 = scmp.eq.s32.totalorder %s14, 3
    %p100 = por %p98, %p99
    %p101 = scmp.ne.s32.totalorder %s90, %s91
    %p102 = scmp.eq.s32.totalorder %s14, 0
    %p103 = por %p101, %p102
    %p104 = scmp.ne.s32.totalorder %s90, %s91
    %p105 = scmp.eq.s32.totalorder %s15, 3
    %p106 = por %p104, %p105
    %p108 = scmp.ne.s32.totalorder %s91, %s107
    %p109 = scmp.eq.s32.totalorder %s15, 0
    %p110 = por %p108, %p109
    %p111 = scmp.le.s32.totalorder 1, %s9
    %p112 = scmp.lt.s32.totalorder %s9, 5
    %p113 = pnand %p111, %p112
    %p114 = pneg %p113
    // Predicated region
    $region9: #{tpu_custom_call.1} parent=5 // pred_check
      _
    $region10: #{tpu_custom_call.1} parent=5 // pred_check_branch
      %116 = sbr.rel (%p113) target = $region12
    $region11: #{tpu_custom_call.1} parent=5 // pred_region
      %s117 = ssub.s32 %s9, 1
      // Predicated region
      $region13: #{tpu_custom_call.1} parent=11 // pred_check
        %p118 = pneg %p56
      $region14: #{tpu_custom_call.1} parent=11 // pred_check_branch
        %120 = sbr.rel (%p118) target = $region16
      $region15: #{tpu_custom_call.1} parent=11 // pred_region
        _
      $region16: #{tpu_custom_call.1} parent=11 // pred_fallthru
        _
      // Predicated region
      $region17: #{tpu_custom_call.1} parent=11 // pred_check
        %p121 = pneg %p77
      $region18: #{tpu_custom_call.1} parent=11 // pred_check_branch
        %123 = sbr.rel (%p121) target = $region20
      $region19: #{tpu_custom_call.1} parent=11 // pred_region
        _
      $region20: #{tpu_custom_call.1} parent=11 // pred_fallthru
        _
    $region12: #{tpu_custom_call.1} parent=5 // pred_fallthru
      _
    %p124 = scmp.lt.s32.totalorder %s9, 4
    // Predicated region
    $region21: #{tpu_custom_call.1} parent=5 // pred_check
      %p125 = pneg %p124
    $region22: #{tpu_custom_call.1} parent=5 // pred_check_branch
      %127 = sbr.rel (%p125) target = $region24
    $region23: #{tpu_custom_call.1} parent=5 // pred_region
      // Predicated region
      $region25: #{tpu_custom_call.1} parent=23 // pred_check
        %p128 = pneg %p29
      $region26: #{tpu_custom_call.1} parent=23 // pred_check_branch
        %130 = sbr.rel (%p128) target = $region28
      $region27: #{tpu_custom_call.1} parent=23 // pred_region
        %s131 = smul.u32 4, %s9
        %p132 = scmp.lt.s32.totalorder %s131, 15
        %s133 = scalar_select %p132, %s131, 15
        %s134 = smul.addr %s133, 2
        %s135 = smul.addr %s134, 8
        %s136 = scalar_lea.vmem %s0, %s135
        %s137 = smul.u32 4, %s9
      $region28: #{tpu_custom_call.1} parent=23 // pred_fallthru
        _
    $region24: #{tpu_custom_call.1} parent=5 // pred_fallthru
      _
    %p138 = scmp.le.s32.totalorder 1, %s9
    %p139 = scmp.lt.s32.totalorder %s9, 5
    %p140 = pnand %p138, %p139
    %p141 = pneg %p140
    // Predicated region
    $region29: #{tpu_custom_call.1} parent=5 // pred_check
      _
    $region30: #{tpu_custom_call.1} parent=5 // pred_check_branch
      %143 = sbr.rel (%p140) target = $region32
    $region31: #{tpu_custom_call.1} parent=5 // pred_region
      %s144 = ssub.s32 %s9, 1
      %s145 = smul.u32 4, %s14
      %p146 = scmp.lt.s32.totalorder %s145, 15
      %s147 = scalar_select %p146, %s145, 15
      %s148 = smul.addr %s147, 2
      %s149 = smul.addr %s148, 8
      %s150 = scalar_lea.vmem %s0, %s149
      %p151 = pneg %p35
      %p152 = pneg %p32
      %p153 = pneg %p56
      %p154 = pneg %p53
      %p155 = pneg %p77
      %p156 = pneg %p74
      %p157 = pneg %p103
      %p158 = pneg %p100
      %s159 = smul.u32 4, %s14
      %p160 = scmp.lt.s32.totalorder %s159, 15
      %s161 = scalar_select %p160, %s159, 15
      %s162 = smul.addr %s161, 8
      %s163 = scalar_lea.vmem %s3, %s162
      %s164 = smul.u32 4, %s14
      %p165 = scmp.lt.s32.totalorder %s164, 15
      %s166 = scalar_select %p165, %s164, 15
      %s167 = smul.addr %s166, 2
      %s168 = smul.addr %s167, 8
      %s169 = scalar_lea.vmem %s0, %s168
      %s170 = smul.u32 4, %s14
      %s171 = smul.u32 4, %s14
      %p172 = scmp.lt.s32.totalorder %s171, 15
      %s173 = scalar_select %p172, %s171, 15
      %s174 = smul.addr %s173, 8
      %s175 = scalar_lea.vmem %s3, %s174
      %s176 = smul.u32 4, %s14
      %v177 = vld [vmem:[%s169] sm:$0xff]
      %v178 = vld [vmem:[%s169 + $0x8] sm:$0xff]
      %v179 = vld [vmem:[%s169 + $0x10] sm:$0xff]
      %v180 = vld [vmem:[%s169 + $0x18] sm:$0xff]
      %v181 = vld [vmem:[%s169 + $0x20] sm:$0xff]
      %v182 = vld [vmem:[%s169 + $0x28] sm:$0xff]
      %v183 = vld [vmem:[%s169 + $0x30] sm:$0xff]
      %v184 = vld [vmem:[%s169 + $0x38] sm:$0xff]
      %v185 = vadd.f32 %v177, %v178
      %v186 = vadd.f32 %v179, %v180
      %v187 = vadd.f32 %v181, %v182
      %v188 = vadd.f32 %v183, %v184
      %193 = vrot.lane.b32.xlu0 %v185, 124
      %v194 = vpop.permute.xlu0 %193
      %195 = vrot.lane.b32.xlu0 %v186, 124
      %v196 = vpop.permute.xlu0 %195
      %197 = vrot.lane.b32.xlu0 %v187, 124
      %v198 = vpop.permute.xlu0 %197
      %199 = vrot.lane.b32.xlu0 %v188, 124
      %v200 = vpop.permute.xlu0 %199
      %v205 = vadd.f32 %v185, %v194
      %v206 = vadd.f32 %v186, %v196
      %v207 = vadd.f32 %v187, %v198
      %v208 = vadd.f32 %v188, %v200
      %v209 = vld [vmem:[%s1] sm:$0xf]
      %v210 = vld [vmem:[%s2] sm:$0x1]
      %v212 = vlaneseq
      %v213 = vshrl.u32 %v212, 7
      %v214 = vsub.s32 0, %v213
      %v215 = vrot.slane %v210, %v214
      %vm217 = vcmask 31744
      %v219 = vsel %vm217, %v205, 0
      %v222 = vsel %vm217, %v206, 0
      %v225 = vsel %vm217, %v207, 0
      %v228 = vsel %vm217, %v208, 0
      %vm230 = vcmask 1043456
      %v232 = vsel %vm230, %v209, 0
      %234 = vmatprep.subr.mxu0 0.0
      %235 = vmatpush1.msra.mxu0 0.0
      %236 = vmatprep.subr.mxu0 0.0
      %237 = vmatpush1.msra.mxu0 0.0
      %238 = vmatprep.subr.mxu0 0.0
      %239 = vmatpush1.msra.mxu0 0.0
      %240 = vmatprep.subr.mxu0 0.0
      %241 = vmatpush1.msra.mxu0 0.0
      %242 = vmatprep.subr.mxu0 0.0
      %243 = vmatpush1.msra.mxu0 0.0
      %244 = vmatprep.subr.mxu0 0.0
      %245 = vmatpush1.msra.mxu0 0.0
      %246 = vmatprep.subr.mxu0 0.0
      %247 = vmatpush1.msra.mxu0 0.0
      %248 = vmatprep.subr.mxu0 0.0
      %249 = vmatpush1.msra.mxu0 0.0
      %250 = vmatprep.subr.mxu0 0.0
      %251 = vmatpush1.msra.mxu0 0.0
      %252 = vmatprep.subr.mxu0 0.0
      %253 = vmatpush1.msra.mxu0 0.0
      %254 = vmatprep.subr.mxu0 0.0
      %255 = vmatpush1.msra.mxu0 0.0
      %256 = vmatprep.subr.mxu0 0.0
      %257 = vmatpush1.msra.mxu0 0.0
      %258 = vmatprep.subr.mxu0 0.0
      %259 = vmatpush1.msra.mxu0 0.0
      %260 = vmatprep.subr.mxu0 0.0
      %261 = vmatpush1.msra.mxu0 0.0
      %262 = vmatprep.subr.mxu0 0.0
      %263 = vmatpush1.msra.mxu0 0.0
      %264 = vmatprep.subr.mxu0 0.0
      %265 = vmatpush1.msra.mxu0 %v232
      %266 = vmatprep.subr.mxu0 0.0
      %267 = vmatpush2.msra.mxu0 0.0
      %268 = vmatprep.subr.mxu0 0.0
      %269 = vmatpush2.msra.mxu0 0.0
      %270 = vmatprep.subr.mxu0 0.0
      %271 = vmatpush2.msra.mxu0 0.0
      %272 = vmatprep.subr.mxu0 0.0
      %273 = vmatpush2.msra.mxu0 0.0
      %274 = vmatprep.subr.mxu0 0.0
      %275 = vmatpush2.msra.mxu0 0.0
      %276 = vmatprep.subr.mxu0 0.0
      %277 = vmatpush2.msra.mxu0 0.0
      %278 = vmatprep.subr.mxu0 0.0
      %279 = vmatpush2.msra.mxu0 0.0
      %280 = vmatprep.subr.mxu0 0.0
      %281 = vmatpush2.msra.mxu0 0.0
      %282 = vmatprep.subr.mxu0 0.0
      %283 = vmatpush2.msra.mxu0 0.0
      %284 = vmatprep.subr.mxu0 0.0
      %285 = vmatpush2.msra.mxu0 0.0
      %286 = vmatprep.subr.mxu0 0.0
      %287 = vmatpush2.msra.mxu0 0.0
      %288 = vmatprep.subr.mxu0 0.0
      %289 = vmatpush2.msra.mxu0 0.0
      %290 = vmatprep.subr.mxu0 0.0
      %291 = vmatpush2.msra.mxu0 0.0
      %292 = vmatprep.subr.mxu0 0.0
      %293 = vmatpush2.msra.mxu0 0.0
      %294 = vmatprep.subr.mxu0 0.0
      %295 = vmatpush2.msra.mxu0 0.0
      %296 = vmatprep.subr.mxu0 0.0
      %297 = vmatpush2.msra.mxu0 0.0
      %298 = vmatprep.mubr.f32.mxu0 0.0
      %299 = vmatmul.mubr.f32.gmra.mxu0 %v219
      %v300 = vpop.f32.mrf.mxu0
      %v301 = vadd.f32 %v215, %v300
      %v302 = vpop.f32.mrf.mxu0
      %303 = vmatprep.mubr.f32.mxu0 0.0
      %304 = vmatmul.mubr.f32.gmra.mxu0 %v222
      %v305 = vpop.f32.mrf.mxu0
      %v306 = vadd.f32 %v215, %v305
      %v307 = vpop.f32.mrf.mxu0
      %308 = vmatprep.mubr.f32.mxu0 0.0
      %309 = vmatmul.mubr.f32.gmra.mxu0 %v225
      %v310 = vpop.f32.mrf.mxu0
      %v311 = vadd.f32 %v215, %v310
      %v312 = vpop.f32.mrf.mxu0
      %313 = vmatprep.mubr.f32.mxu0 0.0
      %314 = vmatmul.mubr.f32.gmra.mxu0 %v228
      %v315 = vpop.f32.mrf.mxu0
      %v316 = vadd.f32 %v215, %v315
      %v317 = vpop.f32.mrf.mxu0
      %318 = vdwg.mxu0
      %vm319 = vcmask 64512
      %320 = vst.msk [vmem:[%s175] sm:$0xff] %vm319, %v301
      %321 = vst.msk [vmem:[%s175 + $0x8] sm:$0xff] %vm319, %v306
      %322 = vst.msk [vmem:[%s175 + $0x10] sm:$0xff] %vm319, %v311
      %323 = vst.msk [vmem:[%s175 + $0x18] sm:$0xff] %vm319, %v316
      %s324 = smul.u32 4, %s14
      %p325 = scmp.lt.s32.totalorder %s324, 15
      %s326 = scalar_select %p325, %s324, 15
      %s327 = smul.addr %s326, 8
      %s328 = scalar_lea.vmem %s3, %s327
      // Predicated region
      $region33: #{tpu_custom_call.1} parent=31 // pred_check
        %p329 = pneg %p100
      $region34: #{tpu_custom_call.1} parent=31 // pred_check_branch
        %331 = sbr.rel (%p329) target = $region36
      $region35: #{tpu_custom_call.1} parent=31 // pred_region
        %s332 = smul.u32 4, %s14
      $region36: #{tpu_custom_call.1} parent=31 // pred_fallthru
        _
    $region32: #{tpu_custom_call.1} parent=5 // pred_fallthru
      _
    %p333 = scmp.le.s32.totalorder 2, %s9
    // Predicated region
    $region37: #{tpu_custom_call.1} parent=5 // pred_check
      %p334 = pneg %p333
    $region38: #{tpu_custom_call.1} parent=5 // pred_check_branch
      %336 = sbr.rel (%p334) target = $region40
    $region39: #{tpu_custom_call.1} parent=5 // pred_region
      %s337 = ssub.s32 %s9, 2
      // Predicated region
      $region41: #{tpu_custom_call.1} parent=39 // pred_check
        %p338 = pneg %p106
      $region42: #{tpu_custom_call.1} parent=39 // pred_check_branch
        %340 = sbr.rel (%p338) target = $region44
      $region43: #{tpu_custom_call.1} parent=39 // pred_region
        %s341 = smul.u32 4, %s15
        %p342 = scmp.lt.s32.totalorder %s341, 15
        %s343 = scalar_select %p342, %s341, 15
        %s344 = smul.addr %s343, 8
        %s345 = scalar_lea.vmem %s3, %s344
      $region44: #{tpu_custom_call.1} parent=39 // pred_fallthru
        _
    $region40: #{tpu_custom_call.1} parent=5 // pred_fallthru
      _
  $region6: #{tpu_custom_call.1} parent=0 // loop_footer
    %s13 = sadd.s32 1, %s9
  $region7: #{tpu_custom_call.1} parent=0 // loop_footer_branch
    %8 = sbr.rel target = $region3
  $region8: #{tpu_custom_call.1} parent=0 // loop_exit
    _

</llo_original>
